<compile_context>
chip_gen: v5e
topology: v5e:2x2
jax: 0.10.0
libtpu: 0.0.40
codegen_flags: <defaults>
</compile_context>

<pallas_src>
import jax
import jax.numpy as jnp
from jax.experimental import pallas as pl
from jax.experimental.pallas import tpu as pltpu

IN_F = 24
HID_F = 18
OUT_F = 4
_LEAKY_SLOPE = 0.01      # torch F.leaky_relu default
_LANE = 128              # TPU lane width; batch tile must be a multiple of this
_MIN_GRID_STEPS = 4      # >= 2 steps per TensorCore on dual-TC chips


def _mlp_kernel(xT_ref, w1_ref, b1_ref, w2_ref, b2_ref, oT_ref):
    """One batch tile per grid step; batch on lanes.

    xT_ref: [IN_F,  TILE_B]  (streamed)          oT_ref: [OUT_F, TILE_B] f32 (streamed)
    w1_ref: [HID_F, IN_F]    (resident)          b1_ref: [HID_F, 1] f32 (resident)
    w2_ref: [OUT_F, HID_F]   (resident)          b2_ref: [OUT_F, 1] f32 (resident)
    """
    xT = xT_ref[...]
    # fc1: W1 @ x^T -> [HID_F, TILE_B]  (MXU, f32 accumulation)
    h = jnp.dot(w1_ref[...], xT, preferred_element_type=jnp.float32)
    h = h + b1_ref[...]                                   # broadcast over lanes (f32)
    h = jnp.where(h > 0, h, _LEAKY_SLOPE * h)             # leaky_relu (VPU, f32)
    # fc4: W2 @ h -> [OUT_F, TILE_B]  (MXU, f32 accumulation)
    o = jnp.dot(w2_ref[...], h.astype(w2_ref.dtype),
                preferred_element_type=jnp.float32)
    oT_ref[...] = (o + b2_ref[...]).astype(oT_ref.dtype)  # lane-dense store


def _round_up(n: int, m: int) -> int:
    return (n + m - 1) // m * m


def _vmem_capacity_bytes() -> int:
    try:
        return pltpu.get_tpu_info().vmem_capacity_bytes
    except Exception:      # query unavailable -> assume the smallest (v7x, 64 MiB)
        return 64 << 20


def _choose_tiling(batch: int):
    """Returns (tile_b, vmem_limit_bytes_or_None), generation-aware."""
    vmem = _vmem_capacity_bytes()
    if vmem >= (128 << 20):        # v5e / v6e: 128 MiB physical VMEM
        max_tile = 256 * 1024      # ~50 MiB double-buffered per-step footprint
        vmem_limit = 80 << 20
    else:                          # v7x: 64 MiB physical per-TC VMEM
        max_tile = 128 * 1024      # ~25 MiB double-buffered per-step footprint
        vmem_limit = 48 << 20      # never request more than physically exists
    # Aim for >= _MIN_GRID_STEPS grid steps (pipeline overlap + both TCs busy);
    # never below one lane group.
    target = -(-batch // _MIN_GRID_STEPS)
    tile_b = max(_LANE, min(max_tile, _round_up(target, _LANE)))
    # Double-buffered per-step VMEM (sublane-padded): xT bf16 24->32 rows, out f32 4->8 rows.
    footprint = 2 * tile_b * (32 * 2 + 8 * 4)
    return tile_b, (vmem_limit if footprint > (12 << 20) else None)


def look_model8_forward(x, w1, b1, w2, b2, *, operand_dtype=jnp.bfloat16):
    """x: [B, 24]; w1: [18, 24] (torch [out,in]); b1: [18]; w2: [4, 18]; b2: [4]."""
    B = x.shape[0]

    # Wrapper-side layout plumbing (plain XLA, fused where possible):
    #   batch-on-lanes -> present x as x^T in the matmul operand dtype;
    #   torch [out,in] weights already are the matmul LHS (no transpose);
    #   biases as column vectors so they broadcast along the lane (batch) axis.
    xT = x.astype(operand_dtype).T                         # [24, B]
    w1m = w1.astype(operand_dtype)                         # [18, 24]
    w2m = w2.astype(operand_dtype)                         # [4, 18]
    b1c = b1.astype(jnp.float32).reshape(HID_F, 1)         # [18, 1]
    b2c = b2.astype(jnp.float32).reshape(OUT_F, 1)         # [4, 1]

    tile_b, vmem_limit = _choose_tiling(B)
    grid = (pl.cdiv(B, tile_b),)    # no jnp.pad copy; ragged last block is masked by Pallas

    cp_kwargs = dict(dimension_semantics=("parallel",))    # megacore batch split on dual-TC chips
    if vmem_limit is not None:
        cp_kwargs["vmem_limit_bytes"] = vmem_limit

    op_bytes = jnp.dtype(operand_dtype).itemsize
    flops = 2 * B * (IN_F * HID_F + HID_F * OUT_F)
    bytes_accessed = (
        op_bytes * B * IN_F                                # x^T read (streamed)
        + 4 * B * OUT_F                                    # out^T write (f32)
        + op_bytes * (IN_F * HID_F + HID_F * OUT_F)        # weights (resident, read once)
        + 4 * (HID_F + OUT_F)                              # biases (f32)
    )

    const = lambda i: (0, 0)   # weights / biases: same block every step -> VMEM-resident
    outT = pl.pallas_call(
        _mlp_kernel,
        out_shape=jax.ShapeDtypeStruct((OUT_F, B), jnp.float32),
        grid=grid,
        in_specs=[
            pl.BlockSpec((IN_F, tile_b), lambda i: (0, i)),    # x^T: streamed per tile
            pl.BlockSpec((HID_F, IN_F), const),                # W1: resident
            pl.BlockSpec((HID_F, 1), const),                   # b1: resident
            pl.BlockSpec((OUT_F, HID_F), const),               # W2: resident
            pl.BlockSpec((OUT_F, 1), const),                   # b2: resident
        ],
        out_specs=pl.BlockSpec((OUT_F, tile_b), lambda i: (0, i)),   # lane-dense stores
        compiler_params=pltpu.CompilerParams(**cp_kwargs),
        cost_estimate=pl.CostEstimate(
            flops=flops, transcendentals=0, bytes_accessed=int(bytes_accessed)),
    )(xT, w1m, b1c, w2m, b2c)

    return outT.T                                              # [B, 4] f32


def _reference_forward_f32(x, w1, b1, w2, b2):
    h = x @ w1.T + b1
    h = jnp.where(h > 0, h, _LEAKY_SLOPE * h)
    return h @ w2.T + b2


def _reference_forward_mirrored(x, w1, b1, w2, b2, operand_dtype=jnp.bfloat16):
    # Mirrors the kernel's numerics: operand-dtype matmul inputs, f32 accumulation,
    # bias add + leaky_relu in f32.
    xb, w1b, w2b = (a.astype(operand_dtype) for a in (x, w1, w2))
    h = jnp.dot(xb, w1b.T, preferred_element_type=jnp.float32) + b1.astype(jnp.float32)
    h = jnp.where(h > 0, h, _LEAKY_SLOPE * h)
    o = jnp.dot(h.astype(operand_dtype), w2b.T, preferred_element_type=jnp.float32)
    return o + b2.astype(jnp.float32)


if __name__ == "__main__":
    key = jax.random.PRNGKey(0)
    k_x, k_w1, k_b1, k_w2, k_b2 = jax.random.split(key, 5)

    # Small batch, deliberately NOT a multiple of 128, to exercise the ragged
    # last-block (masked lane store) path.
    B = 12
    x = jax.random.normal(k_x, (B, IN_F), dtype=jnp.float32)

    # Deterministic "uniform_(-1, 1)" init matching the torch module's parameter shapes.
    w1 = jax.random.uniform(k_w1, (HID_F, IN_F), dtype=jnp.float32, minval=-1.0, maxval=1.0)
    b1 = jax.random.uniform(k_b1, (HID_F,), dtype=jnp.float32, minval=-1.0, maxval=1.0)
    w2 = jax.random.uniform(k_w2, (OUT_F, HID_F), dtype=jnp.float32, minval=-1.0, maxval=1.0)
    b2 = jax.random.uniform(k_b2, (OUT_F,), dtype=jnp.float32, minval=-1.0, maxval=1.0)

    out = jax.block_until_ready(look_model8_forward(x, w1, b1, w2, b2))
    assert out.shape == (B, OUT_F) and out.dtype == jnp.float32

    # Implementation check vs. a reference with identical numerics (bf16 operands, f32 acc).
    ref_mirror = _reference_forward_mirrored(x, w1, b1, w2, b2)
    assert jnp.allclose(out, ref_mirror, atol=5e-2, rtol=1e-2), "mismatch vs mirrored reference"

    # Semantic sanity check vs. the pure-f32 torch forward (only bf16 operand rounding differs).
    ref_f32 = _reference_forward_f32(x, w1, b1, w2, b2)
    assert jnp.allclose(out, ref_f32, atol=0.25, rtol=0.05), "mismatch vs f32 reference"

    print("KERNEL_OK")
</pallas_src>

<mosaic_0001>
module attributes {stable_mosaic.version = 11 : i64} {
  func.func @_mlp_kernel(%arg0: i32, %arg1: memref<24x128xbf16, #tpu.memory_space<vmem>>, %arg2: memref<18x24xbf16, #tpu.memory_space<vmem>>, %arg3: memref<18x1xf32, #tpu.memory_space<vmem>>, %arg4: memref<4x18xbf16, #tpu.memory_space<vmem>>, %arg5: memref<4x1xf32, #tpu.memory_space<vmem>>, %arg6: memref<4x128xf32, #tpu.memory_space<vmem>>) attributes {dimension_semantics = [#tpu.dimension_semantics<parallel>], iteration_bounds = array<i64: 1>, scalar_prefetch = 0 : i64, scratch_operands = 0 : i64, tpu.core_type = #tpu.core_type<tc>, window_params = [{transform_indices = @transform_0, window_bounds = array<i64: 24, 128>}, {pipeline_mode = #tpu.pipeline_mode<synchronous>, transform_indices = @transform_1, window_bounds = array<i64: 18, 24>}, {pipeline_mode = #tpu.pipeline_mode<synchronous>, transform_indices = @transform_2, window_bounds = array<i64: 18, 1>}, {pipeline_mode = #tpu.pipeline_mode<synchronous>, transform_indices = @transform_3, window_bounds = array<i64: 4, 18>}, {pipeline_mode = #tpu.pipeline_mode<synchronous>, transform_indices = @transform_4, window_bounds = array<i64: 4, 1>}, {transform_indices = @transform_5, window_bounds = array<i64: 4, 128>}]} {
    %c0 = arith.constant 0 : index
    %c0_0 = arith.constant 0 : index
    %0 = vector.load %arg1[%c0, %c0_0] : memref<24x128xbf16, #tpu.memory_space<vmem>>, vector<24x128xbf16>
    %c0_1 = arith.constant 0 : index
    %c0_2 = arith.constant 0 : index
    %1 = vector.load %arg2[%c0_1, %c0_2] : memref<18x24xbf16, #tpu.memory_space<vmem>>, vector<18x24xbf16>
    %cst = arith.constant dense<0.000000e+00> : vector<18x128xf32>
    %2 = tpu.matmul %1, %0, %cst {dimension_numbers = #tpu.dot_dimension_numbers<[1], [0], [0], [1], [0, 0, 1, 1], [], []>} : vector<18x24xbf16>, vector<24x128xbf16>, vector<18x128xf32> -> vector<18x128xf32>
    %c0_3 = arith.constant 0 : index
    %c0_4 = arith.constant 0 : index
    %3 = vector.load %arg3[%c0_3, %c0_4] : memref<18x1xf32, #tpu.memory_space<vmem>>, vector<18x1xf32>
    %4 = vector.broadcast %3 : vector<18x1xf32> to vector<18x128xf32>
    %5 = arith.addf %2, %4 : vector<18x128xf32>
    %cst_5 = arith.constant 0.000000e+00 : f32
    %6 = vector.broadcast %cst_5 : f32 to vector<18x128xf32>
    %7 = arith.cmpf ogt, %5, %6 : vector<18x128xf32>
    %cst_6 = arith.constant 0.00999999977 : f32
    %8 = vector.broadcast %cst_6 : f32 to vector<18x128xf32>
    %9 = arith.mulf %8, %5 : vector<18x128xf32>
    %10 = arith.select %7, %5, %9 : vector<18x128xi1>, vector<18x128xf32>
    %c0_7 = arith.constant 0 : index
    %c0_8 = arith.constant 0 : index
    %11 = vector.load %arg4[%c0_7, %c0_8] : memref<4x18xbf16, #tpu.memory_space<vmem>>, vector<4x18xbf16>
    %12 = arith.truncf %10 : vector<18x128xf32> to vector<18x128xbf16>
    %cst_9 = arith.constant dense<0.000000e+00> : vector<4x128xf32>
    %13 = tpu.matmul %11, %12, %cst_9 {dimension_numbers = #tpu.dot_dimension_numbers<[1], [0], [0], [1], [0, 0, 1, 1], [], []>} : vector<4x18xbf16>, vector<18x128xbf16>, vector<4x128xf32> -> vector<4x128xf32>
    %c0_10 = arith.constant 0 : index
    %c0_11 = arith.constant 0 : index
    %14 = vector.load %arg5[%c0_10, %c0_11] : memref<4x1xf32, #tpu.memory_space<vmem>>, vector<4x1xf32>
    %15 = vector.broadcast %14 : vector<4x1xf32> to vector<4x128xf32>
    %16 = arith.addf %13, %15 : vector<4x128xf32>
    %c0_12 = arith.constant 0 : index
    %c0_13 = arith.constant 0 : index
    %17 = vector.load %arg6[%c0_12, %c0_13] : memref<4x128xf32, #tpu.memory_space<vmem>>, vector<4x128xf32>
    tpu.vector_store %arg6[%c0_12, %c0_13], %16 {strides = array<i32>} : memref<4x128xf32, #tpu.memory_space<vmem>>, vector<4x128xf32>,
    return
  }
  func.func @transform_0(%arg0: i32) -> (i32, i32) {
    %c0_i32 = arith.constant 0 : i32
    %c0_i32_0 = arith.constant 0 : i32
    return %c0_i32, %arg0 : i32, i32
  }
  func.func @transform_1(%arg0: i32) -> (i32, i32) {
    %c0_i32 = arith.constant 0 : i32
    %c0_i32_0 = arith.constant 0 : i32
    %c0_i32_1 = arith.constant 0 : i32
    return %c0_i32, %c0_i32_0 : i32, i32
  }
  func.func @transform_2(%arg0: i32) -> (i32, i32) {
    %c0_i32 = arith.constant 0 : i32
    %c0_i32_0 = arith.constant 0 : i32
    %c0_i32_1 = arith.constant 0 : i32
    return %c0_i32, %c0_i32_0 : i32, i32
  }
  func.func @transform_3(%arg0: i32) -> (i32, i32) {
    %c0_i32 = arith.constant 0 : i32
    %c0_i32_0 = arith.constant 0 : i32
    %c0_i32_1 = arith.constant 0 : i32
    return %c0_i32, %c0_i32_0 : i32, i32
  }
  func.func @transform_4(%arg0: i32) -> (i32, i32) {
    %c0_i32 = arith.constant 0 : i32
    %c0_i32_0 = arith.constant 0 : i32
    %c0_i32_1 = arith.constant 0 : i32
    return %c0_i32, %c0_i32_0 : i32, i32
  }
  func.func @transform_5(%arg0: i32) -> (i32, i32) {
    %c0_i32 = arith.constant 0 : i32
    %c0_i32_0 = arith.constant 0 : i32
    return %c0_i32, %arg0 : i32, i32
  }
}

</mosaic_0001>

<llo_original>
// kernel: tpu_custom_call.1
$region0: #{tpu_custom_call.1}
  #allocation0 [shape = 'u32[]', space=smem, size = 0x4, offset = 0x4, fixed_abs, tag = 'smem constant byte address 0x4 - core index']
  #allocation1 [shape = 'u32[72,128]{1,0:T(1,128)}', space=vmem, size = 0x9000, scoped, tag = 'internal scratch']
  %s0 = inlined_call_operand.vmem [shape: bf16[24,12], index: 0, kind: input, shape index: {}]
  %s1 = inlined_call_operand.vmem [shape: bf16[18,24], index: 1, kind: input, shape index: {}]
  %s2 = inlined_call_operand.vmem [shape: f32[18,1], index: 2, kind: input, shape index: {}]
  %s3 = inlined_call_operand.vmem [shape: bf16[4,18], index: 3, kind: input, shape index: {}]
  %s4 = inlined_call_operand.vmem [shape: f32[4,1], index: 4, kind: input, shape index: {}]
  %s5 = inlined_call_operand.hbm [shape: f32[4,12], index: 5, kind: output, shape index: {}]
  %s6 = sld [smem:[#allocation0]]
  $region30: #{tpu_custom_call.1} parent=0
    _
  %s8 = ssub.s32 1, %s6
  %s9 = scalar_select 0, %s8, %s6
  $region1: #{tpu_custom_call.1} parent=0
    #allocation2 [shape = 'u8[2048]{0}', space=vmem, size = 0x800, scoped, tag = 'output window, operand 0, single buffered']
    #allocation3 [shape = 's32[1]{0}', space=sflag, size = 0x4, scoped, tag = 'scoped memory for tpu_custom_call.1']
    %10 = vsyncpa [#allocation3], 0
    // Predicated region
    $region2: #{tpu_custom_call.1} parent=1 // pred_check
      _
    $region3: #{tpu_custom_call.1} parent=1 // pred_check_branch
      %12 = sbr.rel (0) target = $region5
    $region4: #{tpu_custom_call.1} parent=1 // pred_region
      _
    $region5: #{tpu_custom_call.1} parent=1 // pred_fallthru
      _
    // Predicated region
    $region6: #{tpu_custom_call.1} parent=1 // pred_check
      _
    $region7: #{tpu_custom_call.1} parent=1 // pred_check_branch
      %14 = sbr.rel (0) target = $region9
    $region8: #{tpu_custom_call.1} parent=1 // pred_region
      _
    $region9: #{tpu_custom_call.1} parent=1 // pred_fallthru
      _
    // Predicated region
    $region10: #{tpu_custom_call.1} parent=1 // pred_check
      _
    $region11: #{tpu_custom_call.1} parent=1 // pred_check_branch
      %16 = sbr.rel (0) target = $region13
    $region12: #{tpu_custom_call.1} parent=1 // pred_region
      _
    $region13: #{tpu_custom_call.1} parent=1 // pred_fallthru
      _
    // Predicated region
    $region14: #{tpu_custom_call.1} parent=1 // pred_check
      _
    $region15: #{tpu_custom_call.1} parent=1 // pred_check_branch
      %18 = sbr.rel (0) target = $region17
    $region16: #{tpu_custom_call.1} parent=1 // pred_region
      _
    $region17: #{tpu_custom_call.1} parent=1 // pred_fallthru
      _
    // Predicated region
    $region18: #{tpu_custom_call.1} parent=1 // pred_check
      _
    $region19: #{tpu_custom_call.1} parent=1 // pred_check_branch
      %20 = sbr.rel (0) target = $region21
    $region20: #{tpu_custom_call.1} parent=1 // pred_region
      _
    $region21: #{tpu_custom_call.1} parent=1 // pred_fallthru
      _
    %v22 = vld [vmem:[%s0] sm:$0xf]
    %v23 = vld [vmem:[%s0 + $0x4] sm:$0xf]
    %v24 = vld [vmem:[%s0 + $0x8] sm:$0xf]
    %v25 = vld [vmem:[%s1] sm:$0xf]
    %v26 = vld [vmem:[%s1 + $0x4] sm:$0xf]
    %v27 = vld [vmem:[%s1 + $0x8] sm:$0x1]
    %v28 = vld [vmem:[%s2] sm:$0xff]
    %v29 = vld [vmem:[%s2 + $0x8] sm:$0xff]
    %v30 = vld [vmem:[%s2 + $0x10] sm:$0x3]
    %32 = vset.pattern.permute.xlu0 0
    %33 = vperm.xlu0 %32, %v28
    %v34 = vpop.permute.xlu0 %33
    %37 = vset.pattern.permute.xlu0 0
    %38 = vperm.xlu0 %37, %v29
    %v39 = vpop.permute.xlu0 %38
    %42 = vset.pattern.permute.xlu0 0
    %43 = vperm.xlu0 %42, %v30
    %v44 = vpop.permute.xlu0 %43
    %v49 = vunpack.c.l.b16 %v25
    %v50 = vunpack.c.l.b16 %v26
    %v51 = vunpack.c.l.b16 %v27
    %v52 = vpack.c.b16 %v50, %v49
    %v53 = vpack.c.b16 %v51, %v51
    %v57 = vunpack.c.l.b16 %v22
    %v58 = vunpack.c.l.b16 %v23
    %v59 = vunpack.c.l.b16 %v24
    %v60 = vpack.c.b16 %v58, %v57
    %v61 = vpack.c.b16 %v59, %v59
    %vm63 = vcmask 195584
    %v65 = vsel %vm63, %v52, 0
    %v68 = vsel %vm63, %v53, 0
    %vm70 = vcmask 1043456
    %v72 = vsel %vm70, %v61, 0
    %74 = vmatpush.bf16.msra.mxu0 0
    %75 = vmatpush.bf16.msra.mxu0 0
    %76 = vmatpush.bf16.msra.mxu0 0
    %77 = vmatpush.bf16.msra.mxu0 0
    %78 = vmatpush.bf16.msra.mxu0 0
    %79 = vmatpush.bf16.msra.mxu0 0
    %80 = vmatpush.bf16.msra.mxu0 %v72
    %81 = vmatpush.bf16.msra.mxu0 %v60
    %82 = vmatmul.bf16.gmra.mxu0 %v65
    %v83 = vpop.f32.mrf.mxu0
    %v84 = vadd.f32 %v34, %v83
    %v85 = vpop.f32.mrf.mxu0
    %v86 = vadd.f32 %v39, %v85
    %87 = vmatmul.bf16.gmra.mxu0 %v68
    %v88 = vpop.f32.mrf.mxu0
    %v89 = vadd.f32 %v44, %v88
    %v90 = vpop.f32.mrf.mxu0
    %91 = vdwg.mxu0
    %vm92 = vcmp.gt.f32.partialorder %v84, 0.0
    %vm93 = vcmp.gt.f32.partialorder %v86, 0.0
    %vm94 = vcmp.gt.f32.partialorder %v89, 0.0
    %v95 = vmul.f32 %v84, 0.01
    %v96 = vmul.f32 %v86, 0.01
    %v97 = vmul.f32 %v89, 0.01
    %v98 = vsel %vm92, %v84, %v95
    %v99 = vsel %vm93, %v86, %v96
    %v100 = vsel %vm94, %v89, %v97
    %v101 = vld [vmem:[%s3] sm:$0x3]
    %v102 = vpack.c.bf16 %v99, %v98
    %v103 = vpack.c.bf16 %v100, %v100
    %v104 = vld [vmem:[%s4] sm:$0xf]
    %106 = vset.pattern.permute.xlu0 0
    %107 = vperm.xlu0 %106, %v104
    %v108 = vpop.permute.xlu0 %107
    %vm110 = vcmask 146432
    %v112 = vsel %vm110, %v101, 0
    %vm114 = vcmask 1040384
    %v116 = vsel %vm114, %v103, 0
    %118 = vmatpush.bf16.msra.mxu0 0
    %119 = vmatpush.bf16.msra.mxu0 0
    %120 = vmatpush.bf16.msra.mxu0 0
    %121 = vmatpush.bf16.msra.mxu0 0
    %122 = vmatpush.bf16.msra.mxu0 0
    %123 = vmatpush.bf16.msra.mxu0 0
    %124 = vmatpush.bf16.msra.mxu0 %v116
    %125 = vmatpush.bf16.msra.mxu0 %v102
    %126 = vmatmul.bf16.gmra.mxu0 %v112
    %v127 = vpop.f32.mrf.mxu0
    %v128 = vadd.f32 %v108, %v127
    %v129 = vpop.f32.mrf.mxu0
    %130 = vdwg.mxu0
    %131 = vst [vmem:[#allocation2] sm:$0xf] %v128
    // Predicated region
    $region22: #{tpu_custom_call.1} parent=1 // pred_check
      _
    $region23: #{tpu_custom_call.1} parent=1 // pred_check_branch
      %133 = sbr.rel (0) target = $region25
    $region24: #{tpu_custom_call.1} parent=1 // pred_region
      %135 = vsyncadd [#allocation3], 0
      %s137 = sshll.u32 [#allocation2], 4
      %s138 = int_to_ptr.vmem [resolvable:$true] %s137
      %s139 = sshll.u32 %s5, 4
      %s140 = int_to_ptr.hbm [resolvable:$true] %s139
      %142 = dma.vmem_to_hbm [thread:$0]  %s138, 64, %s140, [#allocation3]
    $region25: #{tpu_custom_call.1} parent=1 // pred_fallthru
      _
    // Predicated region
    $region26: #{tpu_custom_call.1} parent=1 // pred_check
      _
    $region27: #{tpu_custom_call.1} parent=1 // pred_check_branch
      %144 = sbr.rel (0) target = $region29
    $region28: #{tpu_custom_call.1} parent=1 // pred_region
      %146 = dma.done [#allocation3], 64
    $region29: #{tpu_custom_call.1} parent=1 // pred_fallthru
      _
    %147 = vsyncpa [#allocation3], 1

</llo_original>
